<compile_context>
chip_gen: v5e
topology: v5e:2x2
jax: 0.10.0
libtpu: 0.0.40
codegen_flags: <defaults>
</compile_context>

<pallas_src>
import jax
import jax.numpy as jnp
from jax.experimental import pallas as pl
from jax.experimental.pallas import tpu as pltpu


def _round_up(n, k):
    return (n + k - 1) // k * k


def _chip_info():
    """Return (physical VMEM bytes, has_two_tensorcores)."""
    kind = ""
    try:
        kind = jax.devices()[0].device_kind.lower()
    except Exception:
        pass
    is_v7 = "v7" in kind
    vmem = None
    get_info = getattr(pltpu, "get_tpu_info", None)
    if get_info is not None:
        try:
            vmem = getattr(get_info(), "vmem_capacity_bytes", None)
        except Exception:
            vmem = None
    if vmem is None:
        # v5e / v6e: 128 MiB VMEM per TensorCore; v7x (and unknown): 64 MiB.
        vmem = (64 << 20) if (is_v7 or not kind) else (128 << 20)
    return int(vmem), is_v7


def _working_set_bytes(tm, tf, D, out_itemsize, compute_itemsize=2):
    """Per-grid-step VMEM footprint: double-buffered pipeline blocks + f32
    scratch accumulator (when output dtype != f32) + the f32 matmul
    intermediates h=(tm, 2*tf) and g=(tm, tf)."""
    block = (tm * D * compute_itemsize          # x tile
             + D * 2 * tf * compute_itemsize    # fused w1|w3 slab
             + tf * D * compute_itemsize        # w2 slab
             + tm * D * out_itemsize)           # output tile
    total = 2 * block                           # double buffering
    if out_itemsize != 4:
        total += tm * D * 4                     # f32 accumulator scratch
    total += tm * 2 * tf * 4 + tm * tf * 4      # f32 h and g intermediates
    return total


def pick_tiles(T, D, F_, *, out_itemsize=4, vmem_capacity=None, two_cores=None):
    """Jointly pick (tm, tf): largest weight-reuse (tm) that fits the real
    VMEM working set, trading tf down before tm, with bounded token padding."""
    if vmem_capacity is None or two_cores is None:
        cap, v7 = _chip_info()
        vmem_capacity = cap if vmem_capacity is None else vmem_capacity
        two_cores = v7 if two_cores is None else two_cores
    budget = int(0.85 * vmem_capacity)          # keep double-buffering intact

    # F tiles: multiples of 128 (lane width) dividing F_, largest first.
    tf_cands = [c for c in (512, 256, 128) if F_ % c == 0] or [F_]

    # Token tiles: always multiples of 16 (bf16 packs 2 rows/sublane).  Prefer
    # LARGE tm with padding; only shrink for genuinely tiny T.
    tm_cap = max(16, _round_up(min(T, 512), 16))
    tm_cands = [c for c in (512, 256, 128, 64, 32, 16) if c <= tm_cap]
    if tm_cap not in tm_cands:
        tm_cands.insert(0, tm_cap)

    chosen = None
    fallback = None
    for tm in tm_cands:                         # tm-major search
        tf_fit = next(
            (tf for tf in tf_cands
             if _working_set_bytes(tm, tf, D, out_itemsize) <= budget), None)
        if tf_fit is None:
            continue
        if fallback is None:
            fallback = (tm, tf_fit)             # largest tm that fits at all
        Tp = _round_up(T, tm)
        if (Tp - T) / Tp <= 0.34:               # bound token-padding waste
            chosen = (tm, tf_fit)
            break
    tm, tf = chosen or fallback or (16, tf_cands[-1])

    # v7x has 2 TensorCores: make sure the "parallel" M axis has >= 2 blocks,
    # otherwise one core idles (worth one extra weight pass only there).
    if two_cores and _round_up(T, tm) // tm < 2 and tm >= 32:
        tm = _round_up(tm // 2, 16)
    return tm, tf


def _make_ffn_kernel(accumulate_in_output: bool):
    def kernel(x_ref, w13_ref, w2_ref, o_ref, *scratch):
        acc_ref = o_ref if accumulate_in_output else scratch[0]
        f = pl.program_id(1)

        @pl.when(f == 0)
        def _():
            acc_ref[...] = jnp.zeros_like(acc_ref)

        x = x_ref[...]
        # Fused gate+up projection: (tm, D) @ (D, 2*tf) -> (tm, 2*tf), f32 acc.
        h = jnp.dot(x, w13_ref[...], preferred_element_type=jnp.float32)
        tf = h.shape[-1] // 2
        h1 = h[:, :tf]                      # gate: x @ W1^T slab (static slice)
        h3 = h[:, tf:]                      # up:   x @ W3^T slab
        g = (h1 * jax.nn.sigmoid(h1)) * h3  # SiLU(h1) * h3, kept in f32
        # Partial down-projection, accumulated over the F axis.
        acc_ref[...] += jnp.dot(g.astype(w2_ref.dtype), w2_ref[...],
                                preferred_element_type=jnp.float32)

        if not accumulate_in_output:
            @pl.when(f == pl.num_programs(1) - 1)
            def _():
                o_ref[...] = acc_ref[...].astype(o_ref.dtype)

    return kernel


def pack_ffn_weights(w1, w3, w2, *, tf, compute_dtype=jnp.bfloat16):
    """One-time (init) packing. w1, w3: [F, D]; w2: [D, F] (nn.Linear layouts)."""
    F_, D = w1.shape
    assert w3.shape == (F_, D) and w2.shape == (D, F_)
    assert F_ % tf == 0
    nf = F_ // tf
    w1t = w1.T.astype(compute_dtype)        # [D, F]
    w3t = w3.T.astype(compute_dtype)        # [D, F]
    # Interleave per f-tile: block f of width 2*tf = [w1t slab f | w3t slab f].
    w13 = jnp.stack([w1t.reshape(D, nf, tf),
                     w3t.reshape(D, nf, tf)], axis=2).reshape(D, 2 * F_)
    w2t = w2.T.astype(compute_dtype)        # [F, D]
    return w13, w2t


def feed_forward_packed(x, w13, w2t, *, tm, tf, compute_dtype=jnp.bfloat16):
    """x: [..., D]; w13: [D, 2F]; w2t: [F, D] (from pack_ffn_weights, same tf)."""
    out_dtype = x.dtype
    orig_shape = x.shape
    D = orig_shape[-1]
    x2 = x.reshape(-1, D)
    T = x2.shape[0]
    F_ = w2t.shape[0]
    assert w13.shape == (D, 2 * F_) and w2t.shape == (F_, D)
    assert F_ % tf == 0

    # Pad tokens to a multiple of the M tile (padding rows are zero; sliced off).
    Tp = _round_up(T, tm)
    if Tp != T:
        x2 = jnp.pad(x2, ((0, Tp - T), (0, 0)))
    x2 = x2.astype(compute_dtype)

    accumulate_in_output = (out_dtype == jnp.float32)
    kernel = _make_ffn_kernel(accumulate_in_output)
    scratch_shapes = []
    if not accumulate_in_output:
        scratch_shapes.append(pltpu.VMEM((tm, D), jnp.float32))

    # Per-generation VMEM budget from the true working set (not a hard cap).
    vmem_capacity, _ = _chip_info()
    needed = _working_set_bytes(tm, tf, D,
                                jnp.dtype(out_dtype).itemsize,
                                jnp.dtype(compute_dtype).itemsize)
    vmem_limit = min(max(int(needed * 1.25) + (1 << 20), 32 << 20),
                     int(0.9 * vmem_capacity))
    vmem_limit = max(vmem_limit, min(needed + (1 << 20), vmem_capacity))

    grid = (Tp // tm, F_ // tf)
    out = pl.pallas_call(
        kernel,
        out_shape=jax.ShapeDtypeStruct((Tp, D), out_dtype),
        grid_spec=pltpu.PrefetchScalarGridSpec(
            num_scalar_prefetch=0,
            grid=grid,
            in_specs=[
                pl.BlockSpec((tm, D), lambda i, f: (i, 0)),       # x tile
                pl.BlockSpec((D, 2 * tf), lambda i, f: (0, f)),   # w1|w3 slab
                pl.BlockSpec((tf, D), lambda i, f: (f, 0)),       # w2 slab
            ],
            out_specs=pl.BlockSpec((tm, D), lambda i, f: (i, 0)),
            scratch_shapes=scratch_shapes,
        ),
        compiler_params=pltpu.CompilerParams(
            # M axis "parallel" -> shards across the 2 TensorCores on v7x;
            # F axis is the reduction (resident output accumulator).
            dimension_semantics=("parallel", "arbitrary"),
            vmem_limit_bytes=int(vmem_limit)),
    )(x2, w13, w2t)

    if Tp != T:
        out = out[:T]
    return out.reshape(orig_shape)


def feed_forward(x, w1, w3, w2, *, tm=None, tf=None, compute_dtype=jnp.bfloat16):
    """Convenience wrapper (packs weights, then runs the kernel).  For repeated
    calls, pack once with pack_ffn_weights and call feed_forward_packed to
    avoid per-call HBM weight transposes."""
    D = x.shape[-1]
    T = x.reshape(-1, D).shape[0]
    F_ = w1.shape[0]
    auto_tm, auto_tf = pick_tiles(T, D, F_,
                                  out_itemsize=jnp.dtype(x.dtype).itemsize)
    tm = auto_tm if tm is None else tm
    tf = auto_tf if tf is None else tf
    w13, w2t = pack_ffn_weights(w1, w3, w2, tf=tf, compute_dtype=compute_dtype)
    return feed_forward_packed(x, w13, w2t, tm=tm, tf=tf,
                               compute_dtype=compute_dtype)


def feed_forward_ref(x, w1, w3, w2):
    h1 = x @ w1.T
    h3 = x @ w3.T
    return ((h1 * jax.nn.sigmoid(h1)) * h3) @ w2.T


if __name__ == "__main__":
    # Small config consistent with ModelArgs(dim=256):
    #   intermediate_size = find_multiple(int(2*4*256/3), 256) = 768
    dim = 256
    inter = 768
    batch, seq = 2, 8
    T = batch * seq

    key = jax.random.PRNGKey(0)
    kx, k1, k3, k2 = jax.random.split(key, 4)
    x = jax.random.normal(kx, (batch, seq, dim), dtype=jnp.float32)
    # nn.Linear weight layouts: [out_features, in_features]
    w1 = jax.random.normal(k1, (inter, dim), dtype=jnp.float32) * 0.02
    w3 = jax.random.normal(k3, (inter, dim), dtype=jnp.float32) * 0.02
    w2 = jax.random.normal(k2, (dim, inter), dtype=jnp.float32) * 0.02

    # Pack weights once ("module init"), then run the kernel.
    tm, tf = pick_tiles(T, dim, inter, out_itemsize=jnp.dtype(x.dtype).itemsize)
    w13, w2t = pack_ffn_weights(w1, w3, w2, tf=tf)
    y = feed_forward_packed(x, w13, w2t, tm=tm, tf=tf)
    jax.block_until_ready(y)

    y_ref = feed_forward_ref(x.reshape(T, dim), w1, w3, w2).reshape(batch, seq, dim)
    err = jnp.max(jnp.abs(y.astype(jnp.float32) - y_ref))
    # bf16 matmuls with f32 accumulation vs full-f32 reference -> loose tol.
    assert jnp.allclose(y.astype(jnp.float32), y_ref, atol=5e-3, rtol=5e-2), (
        f"mismatch vs reference, max abs err = {err}")

    # TODO(synk): tensor-parallel all_reduce over process_group not modeled;
    # single-device forward only.
    print("KERNEL_OK")
</pallas_src>

<mosaic_0001>
module attributes {stable_mosaic.version = 11 : i64} {
  func.func @kernel(%arg0: i32, %arg1: i32, %arg2: memref<16x256xbf16, #tpu.memory_space<vmem>>, %arg3: memref<256x512xbf16, #tpu.memory_space<vmem>>, %arg4: memref<256x256xbf16, #tpu.memory_space<vmem>>, %arg5: memref<16x256xf32, #tpu.memory_space<vmem>>) attributes {dimension_semantics = [#tpu.dimension_semantics<parallel>, #tpu.dimension_semantics<arbitrary>], iteration_bounds = array<i64: 1, 3>, scalar_prefetch = 0 : i64, scratch_operands = 0 : i64, tpu.core_type = #tpu.core_type<tc>, window_params = [{transform_indices = @transform_0, window_bounds = array<i64: 16, 256>}, {transform_indices = @transform_1, window_bounds = array<i64: 256, 512>}, {transform_indices = @transform_2, window_bounds = array<i64: 256, 256>}, {transform_indices = @transform_3, window_bounds = array<i64: 16, 256>}]} {
    %c0_i32 = arith.constant 0 : i32
    %0 = arith.cmpi eq, %arg1, %c0_i32 : i32
    %1 = arith.extui %0 : i1 to i32
    %c0_i32_0 = arith.constant 0 : i32
    %2 = arith.cmpi ne, %1, %c0_i32_0 : i32
    scf.if %2 {
      %cst_12 = arith.constant 0.000000e+00 : f32
      %21 = vector.broadcast %cst_12 : f32 to vector<16x256xf32>
      %c0_13 = arith.constant 0 : index
      %c0_14 = arith.constant 0 : index
      %22 = vector.load %arg5[%c0_13, %c0_14] : memref<16x256xf32, #tpu.memory_space<vmem>>, vector<16x256xf32>
      tpu.vector_store %arg5[%c0_13, %c0_14], %21 {strides = array<i32>} : memref<16x256xf32, #tpu.memory_space<vmem>>, vector<16x256xf32>,
    } else {
    }
    %c0 = arith.constant 0 : index
    %c0_1 = arith.constant 0 : index
    %3 = vector.load %arg2[%c0, %c0_1] : memref<16x256xbf16, #tpu.memory_space<vmem>>, vector<16x256xbf16>
    %c0_2 = arith.constant 0 : index
    %c0_3 = arith.constant 0 : index
    %4 = vector.load %arg3[%c0_2, %c0_3] : memref<256x512xbf16, #tpu.memory_space<vmem>>, vector<256x512xbf16>
    %cst = arith.constant dense<0.000000e+00> : vector<16x512xf32>
    %5 = tpu.matmul %3, %4, %cst {dimension_numbers = #tpu.dot_dimension_numbers<[1], [0], [0], [1], [0, 0, 1, 1], [], []>} : vector<16x256xbf16>, vector<256x512xbf16>, vector<16x512xf32> -> vector<16x512xf32>
    %6 = vector.extract_strided_slice %5 {offsets = [0, 0], sizes = [16, 256], strides = [1, 1]} : vector<16x512xf32> to vector<16x256xf32>
    %7 = vector.extract_strided_slice %5 {offsets = [0, 256], sizes = [16, 256], strides = [1, 1]} : vector<16x512xf32> to vector<16x256xf32>
    %8 = arith.negf %6 : vector<16x256xf32>
    %9 = math.exp %8 : vector<16x256xf32>
    %cst_4 = arith.constant 1.000000e+00 : f32
    %10 = vector.broadcast %cst_4 : f32 to vector<16x256xf32>
    %11 = arith.addf %10, %9 : vector<16x256xf32>
    %12 = arith.divf %10, %11 : vector<16x256xf32>
    %13 = arith.mulf %6, %12 : vector<16x256xf32>
    %14 = arith.mulf %13, %7 : vector<16x256xf32>
    %c0_5 = arith.constant 0 : index
    %c0_6 = arith.constant 0 : index
    %15 = vector.load %arg5[%c0_5, %c0_6] : memref<16x256xf32, #tpu.memory_space<vmem>>, vector<16x256xf32>
    %16 = arith.truncf %14 : vector<16x256xf32> to vector<16x256xbf16>
    %c0_7 = arith.constant 0 : index
    %c0_8 = arith.constant 0 : index
    %17 = vector.load %arg4[%c0_7, %c0_8] : memref<256x256xbf16, #tpu.memory_space<vmem>>, vector<256x256xbf16>
    %cst_9 = arith.constant dense<0.000000e+00> : vector<16x256xf32>
    %18 = tpu.matmul %16, %17, %cst_9 {dimension_numbers = #tpu.dot_dimension_numbers<[1], [0], [0], [1], [0, 0, 1, 1], [], []>} : vector<16x256xbf16>, vector<256x256xbf16>, vector<16x256xf32> -> vector<16x256xf32>
    %19 = arith.addf %15, %18 : vector<16x256xf32>
    %c0_10 = arith.constant 0 : index
    %c0_11 = arith.constant 0 : index
    %20 = vector.load %arg5[%c0_10, %c0_11] : memref<16x256xf32, #tpu.memory_space<vmem>>, vector<16x256xf32>
    tpu.vector_store %arg5[%c0_10, %c0_11], %19 {strides = array<i32>} : memref<16x256xf32, #tpu.memory_space<vmem>>, vector<16x256xf32>,
    return
  }
  func.func @transform_0(%arg0: i32, %arg1: i32) -> (i32, i32) {
    %c0_i32 = arith.constant 0 : i32
    %c0_i32_0 = arith.constant 0 : i32
    return %arg0, %c0_i32 : i32, i32
  }
  func.func @transform_1(%arg0: i32, %arg1: i32) -> (i32, i32) {
    %c0_i32 = arith.constant 0 : i32
    %c0_i32_0 = arith.constant 0 : i32
    return %c0_i32, %arg1 : i32, i32
  }
  func.func @transform_2(%arg0: i32, %arg1: i32) -> (i32, i32) {
    %c0_i32 = arith.constant 0 : i32
    %c0_i32_0 = arith.constant 0 : i32
    return %arg1, %c0_i32 : i32, i32
  }
  func.func @transform_3(%arg0: i32, %arg1: i32) -> (i32, i32) {
    %c0_i32 = arith.constant 0 : i32
    %c0_i32_0 = arith.constant 0 : i32
    return %arg0, %c0_i32 : i32, i32
  }
}

</mosaic_0001>

<llo_original>
// kernel: tpu_custom_call.1
$region0: #{tpu_custom_call.1}
  #allocation0 [shape = 'u32[]', space=smem, size = 0x4, offset = 0x4, fixed_abs, tag = 'smem constant byte address 0x4 - core index']
  #allocation1 [shape = 'u32[72,128]{1,0:T(1,128)}', space=vmem, size = 0x9000, scoped, tag = 'internal scratch']
  %s0 = inlined_call_operand.hbm [shape: bf16[16,256], index: 0, kind: input, shape index: {}]
  %s1 = inlined_call_operand.hbm [shape: bf16[256,1536], index: 1, kind: input, shape index: {}]
  %s2 = inlined_call_operand.hbm [shape: bf16[768,256], index: 2, kind: input, shape index: {}]
  %s3 = inlined_call_operand.hbm [shape: f32[16,256], index: 3, kind: output, shape index: {}]
  %s4 = sld [smem:[#allocation0]]
  $region61: #{tpu_custom_call.1} parent=0
    _
  %s6 = ssub.s32 1, %s4
  %s7 = scalar_select 0, %s6, %s4
  $region1: #{tpu_custom_call.1} parent=0
    #allocation2 [shape = 'u8[8192]{0}', space=vmem, size = 0x2000, scoped, tag = 'input window, operand 0, single buffered']
    #allocation3 [shape = 's32[2]{0}', space=sflag, size = 0x8, scoped, tag = 'scoped memory for tpu_custom_call.1']
    #allocation4 [shape = 's32[2]{0}', space=sflag, size = 0x8, scoped, tag = 'scoped memory for tpu_custom_call.1']
    #allocation5 [shape = 'u8[524288]{0}', space=vmem, size = 0x80000, scoped, tag = 'input window, operand 1']
    #allocation6 [shape = 's32[2]{0}', space=sflag, size = 0x8, scoped, tag = 'scoped memory for tpu_custom_call.1']
    #allocation7 [shape = 'u8[262144]{0}', space=vmem, size = 0x40000, scoped, tag = 'input window, operand 2']
    #allocation8 [shape = 'u8[16384]{0}', space=vmem, size = 0x4000, scoped, tag = 'output window, operand 0, single buffered']
    %8 = vsyncpa [#allocation3], 0
    %9 = vsyncpa [#allocation6], 0
    %s10 = scalar_lea.sflag [#allocation6], 1
    %11 = vsyncpa %s10, 0
    %12 = vsyncpa [#allocation4], 0
    loop: start=0, step=1, limit=5
    $region2: #{tpu_custom_call.1} parent=1 // loop_pre_header
      _
    $region3: #{tpu_custom_call.1} parent=1 // loop_header
      %s14 = sphi 0, %s18
      %p15 = scmp.ge.s32.totalorder %s14, 5
      %s21 = sphi 0, %s33
      %s22 = sphi 0, %s29
      %s23 = sphi 0, %s21
      %s24 = sphi 0, %s22
      %s25 = sphi 0, %s23
      %s26 = sphi 0, %s24
      %s36 = sphi 0, %s38
      %s39 = sphi 0, %s36
      %s40 = sphi 0, %s39
      %s56 = sphi 0, %s40
      %s62 = sphi 0, %s64
      %s65 = sphi 0, %s62
      %s66 = sphi 0, %s65
      %s82 = sphi 0, %s66
      %s88 = sphi 0, %s90
      %s91 = sphi 0, %s88
      %s92 = sphi 0, %s91
      %s108 = sphi 0, %s92
      %s114 = sphi 0, %s116
      %s117 = sphi 0, %s114
      %s118 = sphi 0, %s117
      %s134 = sphi 0, %s118
    $region4: #{tpu_custom_call.1} parent=1 // loop_header_branch
      %17 = sbr.rel (%p15) target = $region8
    $region5: #{tpu_custom_call.1} parent=1 // loop_body
      %s19 = ssub.s32 %s14, 1
      %s20 = ssub.s32 %s14, 2
      %s27 = sadd.s32 1, %s22
      %p28 = scmp.ge.s32.totalorder %s27, 3
      %s29 = scalar_select %p28, 0, %s27
      %s30 = sadd.s32 1, %s21
      %s31 = scalar_select %p28, %s30, %s21
      %p32 = scmp.ge.s32.totalorder %s31, 1
      %s33 = scalar_select %p32, 0, %s31
      %s34 = ssub.s32 %s21, %s33
      %p35 = scmp.eq.s32.totalorder %s34, 0
      %s37 = sadd.s32 %s36, 1
      %s38 = scalar_select %p35, %s36, %s37
      %p41 = pneg %p35
      %p42 = scmp.eq.s32.totalorder %s14, 2
      %p43 = por %p41, %p42
      %p44 = scmp.ne.s32.totalorder %s36, %s39
      %p45 = scmp.eq.s32.totalorder %s14, 0
      %p46 = por %p44, %p45
      %p47 = scmp.ne.s32.totalorder %s36, %s39
      %p48 = scmp.eq.s32.totalorder %s19, 2
      %p49 = por %p47, %p48
      %p50 = scmp.ne.s32.totalorder %s39, %s40
      %p51 = scmp.eq.s32.totalorder %s19, 0
      %p52 = por %p50, %p51
      %p53 = scmp.ne.s32.totalorder %s39, %s40
      %p54 = scmp.eq.s32.totalorder %s20, 2
      %p55 = por %p53, %p54
      %p57 = scmp.ne.s32.totalorder %s40, %s56
      %p58 = scmp.eq.s32.totalorder %s20, 0
      %p59 = por %p57, %p58
      %s60 = ssub.s32 %s22, %s29
      %p61 = scmp.eq.s32.totalorder %s60, 0
      %s63 = sadd.s32 %s62, 1
      %s64 = scalar_select %p61, %s62, %s63
      %p67 = pneg %p61
      %p68 = scmp.eq.s32.totalorder %s14, 2
      %p69 = por %p67, %p68
      %p70 = scmp.ne.s32.totalorder %s62, %s65
      %p71 = scmp.eq.s32.totalorder %s14, 0
      %p72 = por %p70, %p71
      %p73 = scmp.ne.s32.totalorder %s62, %s65
      %p74 = scmp.eq.s32.totalorder %s19, 2
      %p75 = por %p73, %p74
      %p76 = scmp.ne.s32.totalorder %s65, %s66
      %p77 = scmp.eq.s32.totalorder %s19, 0
      %p78 = por %p76, %p77
      %p79 = scmp.ne.s32.totalorder %s65, %s66
      %p80 = scmp.eq.s32.totalorder %s20, 2
      %p81 = por %p79, %p80
      %p83 = scmp.ne.s32.totalorder %s66, %s82
      %p84 = scmp.eq.s32.totalorder %s20, 0
      %p85 = por %p83, %p84
      %s86 = ssub.s32 %s22, %s29
      %p87 = scmp.eq.s32.totalorder %s86, 0
      %s89 = sadd.s32 %s88, 1
      %s90 = scalar_select %p87, %s88, %s89
      %p93 = pneg %p87
      %p94 = scmp.eq.s32.totalorder %s14, 2
      %p95 = por %p93, %p94
      %p96 = scmp.ne.s32.totalorder %s88, %s91
      %p97 = scmp.eq.s32.totalorder %s14, 0
      %p98 = por %p96, %p97
      %p99 = scmp.ne.s32.totalorder %s88, %s91
      %p100 = scmp.eq.s32.totalorder %s19, 2
      %p101 = por %p99, %p100
      %p102 = scmp.ne.s32.totalorder %s91, %s92
      %p103 = scmp.eq.s32.totalorder %s19, 0
      %p104 = por %p102, %p103
      %p105 = scmp.ne.s32.totalorder %s91, %s92
      %p106 = scmp.eq.s32.totalorder %s20, 2
      %p107 = por %p105, %p106
      %p109 = scmp.ne.s32.totalorder %s92, %s108
      %p110 = scmp.eq.s32.totalorder %s20, 0
      %p111 = por %p109, %p110
      %s112 = ssub.s32 %s21, %s33
      %p113 = scmp.eq.s32.totalorder %s112, 0
      %s115 = sadd.s32 %s114, 1
      %s116 = scalar_select %p113, %s114, %s115
      %p119 = pneg %p113
      %p120 = scmp.eq.s32.totalorder %s14, 2
      %p121 = por %p119, %p120
      %p122 = scmp.ne.s32.totalorder %s114, %s117
      %p123 = scmp.eq.s32.totalorder %s14, 0
      %p124 = por %p122, %p123
      %p125 = scmp.ne.s32.totalorder %s114, %s117
      %p126 = scmp.eq.s32.totalorder %s19, 2
      %p127 = por %p125, %p126
      %p128 = scmp.ne.s32.totalorder %s117, %s118
      %p129 = scmp.eq.s32.totalorder %s19, 0
      %p130 = por %p128, %p129
      %p131 = scmp.ne.s32.totalorder %s117, %s118
      %p132 = scmp.eq.s32.totalorder %s20, 2
      %p133 = por %p131, %p132
      %p135 = scmp.ne.s32.totalorder %s118, %s134
      %p136 = scmp.eq.s32.totalorder %s20, 0
      %p137 = por %p135, %p136
      %p138 = scmp.le.s32.totalorder 1, %s14
      %p139 = scmp.lt.s32.totalorder %s14, 4
      %p140 = pnand %p138, %p139
      %p141 = pneg %p140
      // Predicated region
      $region9: #{tpu_custom_call.1} parent=5 // pred_check
        _
      $region10: #{tpu_custom_call.1} parent=5 // pred_check_branch
        %143 = sbr.rel (%p140) target = $region12
      $region11: #{tpu_custom_call.1} parent=5 // pred_region
        %s144 = ssub.s32 %s14, 1
        // Predicated region
        $region13: #{tpu_custom_call.1} parent=11 // pred_check
          %p145 = pneg %p52
        $region14: #{tpu_custom_call.1} parent=11 // pred_check_branch
          %147 = sbr.rel (%p145) target = $region16
        $region15: #{tpu_custom_call.1} parent=11 // pred_region
          %s148 = smul.u32 2, %s23
          %150 = vsyncadd [#allocation3], 0
          %s151 = smul.addr %s148, 2
          %s152 = smul.addr %s151, 4
          %s153 = scalar_lea.hbm %s0, %s152
          %s154 = sshll.u32 %s153, 4
          %s155 = int_to_ptr.hbm [resolvable:$true] %s154
          %s156 = sshll.u32 [#allocation2], 4
          %s157 = int_to_ptr.vmem [resolvable:$true] %s156
          %162 = dma.hbm_to_vmem [thread:$0]  %s155, 256, %s157, [#allocation3], 128, 128, 8
        $region16: #{tpu_custom_call.1} parent=11 // pred_fallthru
          _
      $region12: #{tpu_custom_call.1} parent=5 // pred_fallthru
        _
      %p163 = scmp.lt.s32.totalorder %s14, 3
      // Predicated region
      $region17: #{tpu_custom_call.1} parent=5 // pred_check
        %p164 = pneg %p163
      $region18: #{tpu_custom_call.1} parent=5 // pred_check_branch
        %166 = sbr.rel (%p164) target = $region20
      $region19: #{tpu_custom_call.1} parent=5 // pred_region
        // Predicated region
        $region21: #{tpu_custom_call.1} parent=19 // pred_check
          %p167 = pneg %p72
        $region22: #{tpu_custom_call.1} parent=19 // pred_check_branch
          %169 = sbr.rel (%p167) target = $region24
        $region23: #{tpu_custom_call.1} parent=19 // pred_region
          %s170 = sand.u32 %s14, 1
          %s171 = scalar_lea.sflag [#allocation6], %s170
          %s172 = sand.u32 %s62, 1
          %s173 = smul.addr %s172, 512
          %s174 = scalar_lea.vmem [#allocation5], %s173
          %s175 = smul.u32 4, %s22
          %177 = vsyncadd %s171, 0
          %s178 = smul.addr %s175, 4
          %s179 = scalar_lea.hbm %s1, %s178
          %s180 = sshll.u32 %s179, 4
          %s181 = int_to_ptr.hbm [resolvable:$true] %s180
          %s182 = sshll.u32 %s174, 4
          %s183 = int_to_ptr.vmem [resolvable:$true] %s182
          %188 = dma.hbm_to_vmem [thread:$0]  %s181, 8192, %s183, %s171, 768, 256, 16
        $region24: #{tpu_custom_call.1} parent=19 // pred_fallthru
          _
        // Predicated region
        $region25: #{tpu_custom_call.1} parent=19 // pred_check
          %p189 = pneg %p98
        $region26: #{tpu_custom_call.1} parent=19 // pred_check_branch
          %191 = sbr.rel (%p189) target = $region28
        $region27: #{tpu_custom_call.1} parent=19 // pred_region
          %s192 = sand.u32 %s14, 1
          %s193 = scalar_lea.sflag [#allocation6], %s192
          %s194 = sand.u32 %s88, 1
          %s195 = smul.addr %s194, 256
          %s196 = scalar_lea.vmem [#allocation7], %s195
          %s197 = smul.u32 32, %s22
          %199 = vsyncadd %s193, 0
          %s200 = smul.addr %s197, 2
          %s201 = smul.addr %s200, 4
          %s202 = scalar_lea.hbm %s2, %s201
          %s203 = sshll.u32 %s202, 4
          %s204 = int_to_ptr.hbm [resolvable:$true] %s203
          %s205 = sshll.u32 %s196, 4
          %s206 = int_to_ptr.vmem [resolvable:$true] %s205
          %211 = dma.hbm_to_vmem [thread:$0]  %s204, 4096, %s206, %s193, 128, 128, 8
        $region28: #{tpu_custom_call.1} parent=19 // pred_fallthru
          _
      $region20: #{tpu_custom_call.1} parent=5 // pred_fallthru
        _
      %p212 = scmp.le.s32.totalorder 1, %s14
      %p213 = scmp.lt.s32.totalorder %s14, 4
      %p214 = pnand %p212, %p213
      %p215 = pneg %p214
      // Predicated region
      $region29: #{tpu_custom_call.1} parent=5 // pred_check
        _
      $region30: #{tpu_custom_call.1} parent=5 // pred_check_branch
        %217 = sbr.rel (%p214) target = $region32
      $region31: #{tpu_custom_call.1} parent=5 // pred_region
        %s218 = ssub.s32 %s14, 1
        // Predicated region
        $region33: #{tpu_custom_call.1} parent=31 // pred_check
          %p219 = pneg %p52
        $region34: #{tpu_custom_call.1} parent=31 // pred_check_branch
          %221 = sbr.rel (%p219) target = $region36
        $region35: #{tpu_custom_call.1} parent=31 // pred_region
          %223 = dma.done [#allocation3], 256
        $region36: #{tpu_custom_call.1} parent=31 // pred_fallthru
          _
        %s224 = sand.u32 %s19, 1
        %s225 = scalar_lea.sflag [#allocation6], %s224
        %s226 = sand.u32 %s65, 1
        %s227 = smul.addr %s226, 512
        %s228 = scalar_lea.vmem [#allocation5], %s227
        // Predicated region
        $region37: #{tpu_custom_call.1} parent=31 // pred_check
          %p229 = pneg %p78
        $region38: #{tpu_custom_call.1} parent=31 // pred_check_branch
          %231 = sbr.rel (%p229) target = $region40
        $region39: #{tpu_custom_call.1} parent=31 // pred_region
          %233 = dma.done %s225, 8192
        $region40: #{tpu_custom_call.1} parent=31 // pred_fallthru
          _
        %s234 = sand.u32 %s19, 1
        %s235 = scalar_lea.sflag [#allocation6], %s234
        %s236 = sand.u32 %s91, 1
        %s237 = smul.addr %s236, 256
        %s238 = scalar_lea.vmem [#allocation7], %s237
        // Predicated region
        $region41: #{tpu_custom_call.1} parent=31 // pred_check
          %p239 = pneg %p104
        $region42: #{tpu_custom_call.1} parent=31 // pred_check_branch
          %241 = sbr.rel (%p239) target = $region44
        $region43: #{tpu_custom_call.1} parent=31 // pred_region
          %243 = dma.done %s235, 4096
        $region44: #{tpu_custom_call.1} parent=31 // pred_fallthru
          _
        %p244 = pneg %p52
        %p245 = pneg %p49
        %s246 = sand.u32 %s19, 1
        %s247 = scalar_lea.sflag [#allocation6], %s246
        %s248 = sand.u32 %s65, 1
        %s249 = smul.addr %s248, 512
        %s250 = scalar_lea.vmem [#allocation5], %s249
        %p251 = pneg %p78
        %p252 = pneg %p75
        %s253 = sand.u32 %s19, 1
        %s254 = scalar_lea.sflag [#allocation6], %s253
        %s255 = sand.u32 %s91, 1
        %s256 = smul.addr %s255, 256
        %s257 = scalar_lea.vmem [#allocation7], %s256
        %p258 = pneg %p104
        %p259 = pneg %p101
        %p260 = pneg %p130
        %p261 = pneg %p127
        %s262 = smul.u32 2, %s23
        %s263 = smul.u32 4, %s24
        %s264 = smul.u32 32, %s24
        %s265 = smul.u32 2, %s23
        %p266 = scmp.eq.s32.totalorder %s24, 0
        // Predicated region
        $region45: #{tpu_custom_call.1} parent=31 // pred_check
          %p267 = pneg %p266
        $region46: #{tpu_custom_call.1} parent=31 // pred_check_branch
          %269 = sbr.rel (%p267) target = $region48
        $region47: #{tpu_custom_call.1} parent=31 // pred_region
          %270 = vst [vmem:[#allocation8] sm:$0xff] 0.0
          %271 = vst [vmem:[#allocation8 + $0x8] sm:$0xff] 0.0
          %272 = vst [vmem:[#allocation8 + $0x10] sm:$0xff] 0.0
          %273 = vst [vmem:[#allocation8 + $0x18] sm:$0xff] 0.0
        $region48: #{tpu_custom_call.1} parent=31 // pred_fallthru
          _
        %v274 = vld [vmem:[#allocation2] sm:$0xff]
        %v275 = vld [vmem:[#allocation2 + $0x8] sm:$0xff]
        %v276 = vld [vmem:[%s228] sm:$0xff]
        %v277 = vld [vmem:[%s228 + $0x8] sm:$0xff]
        %v278 = vld [vmem:[%s228 + $0x10] sm:$0xff]
        %v279 = vld [vmem:[%s228 + $0x18] sm:$0xff]
        %v280 = vld [vmem:[%s228 + $0x20] sm:$0xff]
        %v281 = vld [vmem:[%s228 + $0x28] sm:$0xff]
        %v282 = vld [vmem:[%s228 + $0x30] sm:$0xff]
        %v283 = vld [vmem:[%s228 + $0x38] sm:$0xff]
        %v284 = vld [vmem:[%s228 + $0x40] sm:$0xff]
        %v285 = vld [vmem:[%s228 + $0x48] sm:$0xff]
        %v286 = vld [vmem:[%s228 + $0x50] sm:$0xff]
        %v287 = vld [vmem:[%s228 + $0x58] sm:$0xff]
        %v288 = vld [vmem:[%s228 + $0x60] sm:$0xff]
        %v289 = vld [vmem:[%s228 + $0x68] sm:$0xff]
        %v290 = vld [vmem:[%s228 + $0x70] sm:$0xff]
        %v291 = vld [vmem:[%s228 + $0x78] sm:$0xff]
        %v292 = vld [vmem:[%s228 + $0x80] sm:$0xff]
        %v293 = vld [vmem:[%s228 + $0x88] sm:$0xff]
        %v294 = vld [vmem:[%s228 + $0x90] sm:$0xff]
        %v295 = vld [vmem:[%s228 + $0x98] sm:$0xff]
        %v296 = vld [vmem:[%s228 + $0xa0] sm:$0xff]
        %v297 = vld [vmem:[%s228 + $0xa8] sm:$0xff]
        %v298 = vld [vmem:[%s228 + $0xb0] sm:$0xff]
        %v299 = vld [vmem:[%s228 + $0xb8] sm:$0xff]
        %v300 = vld [vmem:[%s228 + $0xc0] sm:$0xff]
        %v301 = vld [vmem:[%s228 + $0xc8] sm:$0xff]
        %v302 = vld [vmem:[%s228 + $0xd0] sm:$0xff]
        %v303 = vld [vmem:[%s228 + $0xd8] sm:$0xff]
        %v304 = vld [vmem:[%s228 + $0xe0] sm:$0xff]
        %v305 = vld [vmem:[%s228 + $0xe8] sm:$0xff]
        %v306 = vld [vmem:[%s228 + $0xf0] sm:$0xff]
        %v307 = vld [vmem:[%s228 + $0xf8] sm:$0xff]
        %v308 = vld [vmem:[%s228 + $0x100] sm:$0xff]
        %v309 = vld [vmem:[%s228 + $0x108] sm:$0xff]
        %v310 = vld [vmem:[%s228 + $0x110] sm:$0xff]
        %v311 = vld [vmem:[%s228 + $0x118] sm:$0xff]
        %v312 = vld [vmem:[%s228 + $0x120] sm:$0xff]
        %v313 = vld [vmem:[%s228 + $0x128] sm:$0xff]
        %v314 = vld [vmem:[%s228 + $0x130] sm:$0xff]
        %v315 = vld [vmem:[%s228 + $0x138] sm:$0xff]
        %v316 = vld [vmem:[%s228 + $0x140] sm:$0xff]
        %v317 = vld [vmem:[%s228 + $0x148] sm:$0xff]
        %v318 = vld [vmem:[%s228 + $0x150] sm:$0xff]
        %v319 = vld [vmem:[%s228 + $0x158] sm:$0xff]
        %v320 = vld [vmem:[%s228 + $0x160] sm:$0xff]
        %v321 = vld [vmem:[%s228 + $0x168] sm:$0xff]
        %v322 = vld [vmem:[%s228 + $0x170] sm:$0xff]
        %v323 = vld [vmem:[%s228 + $0x178] sm:$0xff]
        %v324 = vld [vmem:[%s228 + $0x180] sm:$0xff]
        %v325 = vld [vmem:[%s228 + $0x188] sm:$0xff]
        %v326 = vld [vmem:[%s228 + $0x190] sm:$0xff]
        %v327 = vld [vmem:[%s228 + $0x198] sm:$0xff]
        %v328 = vld [vmem:[%s228 + $0x1a0] sm:$0xff]
        %v329 = vld [vmem:[%s228 + $0x1a8] sm:$0xff]
        %v330 = vld [vmem:[%s228 + $0x1b0] sm:$0xff]
        %v331 = vld [vmem:[%s228 + $0x1b8] sm:$0xff]
        %v332 = vld [vmem:[%s228 + $0x1c0] sm:$0xff]
        %v333 = vld [vmem:[%s228 + $0x1c8] sm:$0xff]
        %v334 = vld [vmem:[%s228 + $0x1d0] sm:$0xff]
        %v335 = vld [vmem:[%s228 + $0x1d8] sm:$0xff]
        %v336 = vld [vmem:[%s228 + $0x1e0] sm:$0xff]
        %v337 = vld [vmem:[%s228 + $0x1e8] sm:$0xff]
        %v338 = vld [vmem:[%s228 + $0x1f0] sm:$0xff]
        %v339 = vld [vmem:[%s228 + $0x1f8] sm:$0xff]
        %v342 = vunpack.c.l.b16 %v274
        %v343 = vunpack.c.h.b16 %v274
        %v344 = vunpack.c.l.b16 %v275
        %v345 = vunpack.c.h.b16 %v275
        %v346 = vpack.c.b16 %v344, %v342
        %v347 = vpack.c.b16 %v345, %v343
        %v414 = vunpack.c.l.b16 %v276
        %v415 = vunpack.c.h.b16 %v276
        %v416 = vunpack.c.l.b16 %v277
        %v417 = vunpack.c.h.b16 %v277
        %v418 = vunpack.c.l.b16 %v278
        %v419 = vunpack.c.h.b16 %v278
        %v420 = vunpack.c.l.b16 %v279
        %v421 = vunpack.c.h.b16 %v279
        %v422 = vunpack.c.l.b16 %v280
        %v423 = vunpack.c.h.b16 %v280
        %v424 = vunpack.c.l.b16 %v281
        %v425 = vunpack.c.h.b16 %v281
        %v426 = vunpack.c.l.b16 %v282
        %v427 = vunpack.c.h.b16 %v282
        %v428 = vunpack.c.l.b16 %v283
        %v429 = vunpack.c.h.b16 %v283
        %v430 = vunpack.c.l.b16 %v284
        %v431 = vunpack.c.h.b16 %v284
        %v432 = vunpack.c.l.b16 %v285
        %v433 = vunpack.c.h.b16 %v285
        %v434 = vunpack.c.l.b16 %v286
        %v435 = vunpack.c.h.b16 %v286
        %v436 = vunpack.c.l.b16 %v287
        %v437 = vunpack.c.h.b16 %v287
        %v438 = vunpack.c.l.b16 %v288
        %v439 = vunpack.c.h.b16 %v288
        %v440 = vunpack.c.l.b16 %v289
        %v441 = vunpack.c.h.b16 %v289
        %v442 = vunpack.c.l.b16 %v290
        %v443 = vunpack.c.h.b16 %v290
        %v444 = vunpack.c.l.b16 %v291
        %v445 = vunpack.c.h.b16 %v291
        %v446 = vunpack.c.l.b16 %v292
        %v447 = vunpack.c.h.b16 %v292
        %v448 = vunpack.c.l.b16 %v293
        %v449 = vunpack.c.h.b16 %v293
        %v450 = vunpack.c.l.b16 %v294
        %v451 = vunpack.c.h.b16 %v294
        %v452 = vunpack.c.l.b16 %v295
        %v453 = vunpack.c.h.b16 %v295
        %v454 = vunpack.c.l.b16 %v296
        %v455 = vunpack.c.h.b16 %v296
        %v456 = vunpack.c.l.b16 %v297
        %v457 = vunpack.c.h.b16 %v297
        %v458 = vunpack.c.l.b16 %v298
        %v459 = vunpack.c.h.b16 %v298
        %v460 = vunpack.c.l.b16 %v299
        %v461 = vunpack.c.h.b16 %v299
        %v462 = vunpack.c.l.b16 %v300
        %v463 = vunpack.c.h.b16 %v300
        %v464 = vunpack.c.l.b16 %v301
        %v465 = vunpack.c.h.b16 %v301
        %v466 = vunpack.c.l.b16 %v302
        %v467 = vunpack.c.h.b16 %v302
        %v468 = vunpack.c.l.b16 %v303
        %v469 = vunpack.c.h.b16 %v303
        %v470 = vunpack.c.l.b16 %v304
        %v471 = vunpack.c.h.b16 %v304
        %v472 = vunpack.c.l.b16 %v305
        %v473 = vunpack.c.h.b16 %v305
        %v474 = vunpack.c.l.b16 %v306
        %v475 = vunpack.c.h.b16 %v306
        %v476 = vunpack.c.l.b16 %v307
        %v477 = vunpack.c.h.b16 %v307
        %v478 = vunpack.c.l.b16 %v308
        %v479 = vunpack.c.h.b16 %v308
        %v480 = vunpack.c.l.b16 %v309
        %v481 = vunpack.c.h.b16 %v309
        %v482 = vunpack.c.l.b16 %v310
        %v483 = vunpack.c.h.b16 %v310
        %v484 = vunpack.c.l.b16 %v311
        %v485 = vunpack.c.h.b16 %v311
        %v486 = vunpack.c.l.b16 %v312
        %v487 = vunpack.c.h.b16 %v312
        %v488 = vunpack.c.l.b16 %v313
        %v489 = vunpack.c.h.b16 %v313
        %v490 = vunpack.c.l.b16 %v314
        %v491 = vunpack.c.h.b16 %v314
        %v492 = vunpack.c.l.b16 %v315
        %v493 = vunpack.c.h.b16 %v315
        %v494 = vunpack.c.l.b16 %v316
        %v495 = vunpack.c.h.b16 %v316
        %v496 = vunpack.c.l.b16 %v317
        %v497 = vunpack.c.h.b16 %v317
        %v498 = vunpack.c.l.b16 %v318
        %v499 = vunpack.c.h.b16 %v318
        %v500 = vunpack.c.l.b16 %v319
        %v501 = vunpack.c.h.b16 %v319
        %v502 = vunpack.c.l.b16 %v320
        %v503 = vunpack.c.h.b16 %v320
        %v504 = vunpack.c.l.b16 %v321
        %v505 = vunpack.c.h.b16 %v321
        %v506 = vunpack.c.l.b16 %v322
        %v507 = vunpack.c.h.b16 %v322
        %v508 = vunpack.c.l.b16 %v323
        %v509 = vunpack.c.h.b16 %v323
        %v510 = vunpack.c.l.b16 %v324
        %v511 = vunpack.c.h.b16 %v324
        %v512 = vunpack.c.l.b16 %v325
        %v513 = vunpack.c.h.b16 %v325
        %v514 = vunpack.c.l.b16 %v326
        %v515 = vunpack.c.h.b16 %v326
        %v516 = vunpack.c.l.b16 %v327
        %v517 = vunpack.c.h.b16 %v327
        %v518 = vunpack.c.l.b16 %v328
        %v519 = vunpack.c.h.b16 %v328
        %v520 = vunpack.c.l.b16 %v329
        %v521 = vunpack.c.h.b16 %v329
        %v522 = vunpack.c.l.b16 %v330
        %v523 = vunpack.c.h.b16 %v330
        %v524 = vunpack.c.l.b16 %v331
        %v525 = vunpack.c.h.b16 %v331
        %v526 = vunpack.c.l.b16 %v332
        %v527 = vunpack.c.h.b16 %v332
        %v528 = vunpack.c.l.b16 %v333
        %v529 = vunpack.c.h.b16 %v333
        %v530 = vunpack.c.l.b16 %v334
        %v531 = vunpack.c.h.b16 %v334
        %v532 = vunpack.c.l.b16 %v335
        %v533 = vunpack.c.h.b16 %v335
        %v534 = vunpack.c.l.b16 %v336
        %v535 = vunpack.c.h.b16 %v336
        %v536 = vunpack.c.l.b16 %v337
        %v537 = vunpack.c.h.b16 %v337
        %v538 = vunpack.c.l.b16 %v338
        %v539 = vunpack.c.h.b16 %v338
        %v540 = vunpack.c.l.b16 %v339
        %v541 = vunpack.c.h.b16 %v339
        %v542 = vpack.c.b16 %v418, %v414
        %v543 = vpack.c.b16 %v419, %v415
        %v544 = vpack.c.b16 %v420, %v416
        %v545 = vpack.c.b16 %v421, %v417
        %v546 = vpack.c.b16 %v426, %v422
        %v547 = vpack.c.b16 %v427, %v423
        %v548 = vpack.c.b16 %v428, %v424
        %v549 = vpack.c.b16 %v429, %v425
        %v550 = vpack.c.b16 %v434, %v430
        %v551 = vpack.c.b16 %v435, %v431
        %v552 = vpack.c.b16 %v436, %v432
        %v553 = vpack.c.b16 %v437, %v433
        %v554 = vpack.c.b16 %v442, %v438
        %v555 = vpack.c.b16 %v443, %v439
        %v556 = vpack.c.b16 %v444, %v440
        %v557 = vpack.c.b16 %v445, %v441
        %v558 = vpack.c.b16 %v450, %v446
        %v559 = vpack.c.b16 %v451, %v447
        %v560 = vpack.c.b16 %v452, %v448
        %v561 = vpack.c.b16 %v453, %v449
        %v562 = vpack.c.b16 %v458, %v454
        %v563 = vpack.c.b16 %v459, %v455
        %v564 = vpack.c.b16 %v460, %v456
        %v565 = vpack.c.b16 %v461, %v457
        %v566 = vpack.c.b16 %v466, %v462
        %v567 = vpack.c.b16 %v467, %v463
        %v568 = vpack.c.b16 %v468, %v464
        %v569 = vpack.c.b16 %v469, %v465
        %v570 = vpack.c.b16 %v474, %v470
        %v571 = vpack.c.b16 %v475, %v471
        %v572 = vpack.c.b16 %v476, %v472
        %v573 = vpack.c.b16 %v477, %v473
        %v574 = vpack.c.b16 %v482, %v478
        %v575 = vpack.c.b16 %v483, %v479
        %v576 = vpack.c.b16 %v484, %v480
        %v577 = vpack.c.b16 %v485, %v481
        %v578 = vpack.c.b16 %v490, %v486
        %v579 = vpack.c.b16 %v491, %v487
        %v580 = vpack.c.b16 %v492, %v488
        %v581 = vpack.c.b16 %v493, %v489
        %v582 = vpack.c.b16 %v498, %v494
        %v583 = vpack.c.b16 %v499, %v495
        %v584 = vpack.c.b16 %v500, %v496
        %v585 = vpack.c.b16 %v501, %v497
        %v586 = vpack.c.b16 %v506, %v502
        %v587 = vpack.c.b16 %v507, %v503
        %v588 = vpack.c.b16 %v508, %v504
        %v589 = vpack.c.b16 %v509, %v505
        %v590 = vpack.c.b16 %v514, %v510
        %v591 = vpack.c.b16 %v515, %v511
        %v592 = vpack.c.b16 %v516, %v512
        %v593 = vpack.c.b16 %v517, %v513
        %v594 = vpack.c.b16 %v522, %v518
        %v595 = vpack.c.b16 %v523, %v519
        %v596 = vpack.c.b16 %v524, %v520
        %v597 = vpack.c.b16 %v525, %v521
        %v598 = vpack.c.b16 %v530, %v526
        %v599 = vpack.c.b16 %v531, %v527
        %v600 = vpack.c.b16 %v532, %v528
        %v601 = vpack.c.b16 %v533, %v529
        %v602 = vpack.c.b16 %v538, %v534
        %v603 = vpack.c.b16 %v539, %v535
        %v604 = vpack.c.b16 %v540, %v536
        %v605 = vpack.c.b16 %v541, %v537
        %670 = vmatpush.bf16.msra.mxu0 %v570
        %671 = vmatpush.bf16.msra.mxu0 %v566
        %672 = vmatpush.bf16.msra.mxu0 %v562
        %673 = vmatpush.bf16.msra.mxu0 %v558
        %674 = vmatpush.bf16.msra.mxu0 %v554
        %675 = vmatpush.bf16.msra.mxu0 %v550
        %676 = vmatpush.bf16.msra.mxu0 %v546
        %677 = vmatpush.bf16.msra.mxu0 %v542
        %678 = vmatmul.bf16.gmra.mxu0 %v346
        %v679 = vpop.f32.mrf.mxu0
        %v680 = vadd.f32 0.0, %v679
        %v681 = vpop.f32.mrf.mxu0
        %v682 = vadd.f32 0.0, %v681
        %683 = vdwg.mxu0
        %684 = vmatpush.bf16.msra.mxu0 %v602
        %685 = vmatpush.bf16.msra.mxu0 %v598
        %686 = vmatpush.bf16.msra.mxu0 %v594
        %687 = vmatpush.bf16.msra.mxu0 %v590
        %688 = vmatpush.bf16.msra.mxu0 %v586
        %689 = vmatpush.bf16.msra.mxu0 %v582
        %690 = vmatpush.bf16.msra.mxu0 %v578
        %691 = vmatpush.bf16.msra.mxu0 %v574
        %692 = vmatmul.bf16.gmra.mxu0 %v347
        %v693 = vpop.f32.mrf.mxu0
        %v694 = vadd.f32 %v680, %v693
        %v695 = vpop.f32.mrf.mxu0
        %v696 = vadd.f32 %v682, %v695
        %697 = vdwg.mxu0
        %698 = vmatpush.bf16.msra.mxu0 %v571
        %699 = vmatpush.bf16.msra.mxu0 %v567
        %700 = vmatpush.bf16.msra.mxu0 %v563
        %701 = vmatpush.bf16.msra.mxu0 %v559
        %702 = vmatpush.bf16.msra.mxu0 %v555
        %703 = vmatpush.bf16.msra.mxu0 %v551
        %704 = vmatpush.bf16.msra.mxu0 %v547
        %705 = vmatpush.bf16.msra.mxu0 %v543
        %706 = vmatmul.bf16.gmra.mxu0 %v346
        %v707 = vpop.f32.mrf.mxu0
        %v708 = vadd.f32 0.0, %v707
        %v709 = vpop.f32.mrf.mxu0
        %v710 = vadd.f32 0.0, %v709
        %711 = vdwg.mxu0
        %712 = vmatpush.bf16.msra.mxu0 %v603
        %713 = vmatpush.bf16.msra.mxu0 %v599
        %714 = vmatpush.bf16.msra.mxu0 %v595
        %715 = vmatpush.bf16.msra.mxu0 %v591
        %716 = vmatpush.bf16.msra.mxu0 %v587
        %717 = vmatpush.bf16.msra.mxu0 %v583
        %718 = vmatpush.bf16.msra.mxu0 %v579
        %719 = vmatpush.bf16.msra.mxu0 %v575
        %720 = vmatmul.bf16.gmra.mxu0 %v347
        %v721 = vpop.f32.mrf.mxu0
        %v722 = vadd.f32 %v708, %v721
        %v723 = vpop.f32.mrf.mxu0
        %v724 = vadd.f32 %v710, %v723
        %725 = vdwg.mxu0
        %726 = vmatpush.bf16.msra.mxu0 %v572
        %727 = vmatpush.bf16.msra.mxu0 %v568
        %728 = vmatpush.bf16.msra.mxu0 %v564
        %729 = vmatpush.bf16.msra.mxu0 %v560
        %730 = vmatpush.bf16.msra.mxu0 %v556
        %731 = vmatpush.bf16.msra.mxu0 %v552
        %732 = vmatpush.bf16.msra.mxu0 %v548
        %733 = vmatpush.bf16.msra.mxu0 %v544
        %734 = vmatmul.bf16.gmra.mxu0 %v346
        %v735 = vpop.f32.mrf.mxu0
        %v736 = vadd.f32 0.0, %v735
        %v737 = vpop.f32.mrf.mxu0
        %v738 = vadd.f32 0.0, %v737
        %739 = vdwg.mxu0
        %740 = vmatpush.bf16.msra.mxu0 %v604
        %741 = vmatpush.bf16.msra.mxu0 %v600
        %742 = vmatpush.bf16.msra.mxu0 %v596
        %743 = vmatpush.bf16.msra.mxu0 %v592
        %744 = vmatpush.bf16.msra.mxu0 %v588
        %745 = vmatpush.bf16.msra.mxu0 %v584
        %746 = vmatpush.bf16.msra.mxu0 %v580
        %747 = vmatpush.bf16.msra.mxu0 %v576
        %748 = vmatmul.bf16.gmra.mxu0 %v347
        %v749 = vpop.f32.mrf.mxu0
        %v750 = vadd.f32 %v736, %v749
        %v751 = vpop.f32.mrf.mxu0
        %v752 = vadd.f32 %v738, %v751
        %753 = vdwg.mxu0
        %754 = vmatpush.bf16.msra.mxu0 %v573
        %755 = vmatpush.bf16.msra.mxu0 %v569
        %756 = vmatpush.bf16.msra.mxu0 %v565
        %757 = vmatpush.bf16.msra.mxu0 %v561
        %758 = vmatpush.bf16.msra.mxu0 %v557
        %759 = vmatpush.bf16.msra.mxu0 %v553
        %760 = vmatpush.bf16.msra.mxu0 %v549
        %761 = vmatpush.bf16.msra.mxu0 %v545
        %762 = vmatmul.bf16.gmra.mxu0 %v346
        %v763 = vpop.f32.mrf.mxu0
        %v764 = vadd.f32 0.0, %v763
        %v765 = vpop.f32.mrf.mxu0
        %v766 = vadd.f32 0.0, %v765
        %767 = vdwg.mxu0
        %768 = vmatpush.bf16.msra.mxu0 %v605
        %769 = vmatpush.bf16.msra.mxu0 %v601
        %770 = vmatpush.bf16.msra.mxu0 %v597
        %771 = vmatpush.bf16.msra.mxu0 %v593
        %772 = vmatpush.bf16.msra.mxu0 %v589
        %773 = vmatpush.bf16.msra.mxu0 %v585
        %774 = vmatpush.bf16.msra.mxu0 %v581
        %775 = vmatpush.bf16.msra.mxu0 %v577
        %776 = vmatmul.bf16.gmra.mxu0 %v347
        %v777 = vpop.f32.mrf.mxu0
        %v778 = vadd.f32 %v764, %v777
        %v779 = vpop.f32.mrf.mxu0
        %v780 = vadd.f32 %v766, %v779
        %781 = vdwg.mxu0
        %v782 = vxor.u32 %v694, 2147483648
        %v783 = vxor.u32 %v722, 2147483648
        %v784 = vxor.u32 %v696, 2147483648
        %v785 = vxor.u32 %v724, 2147483648
        %v786 = vmul.f32 %v782, 1.442695
        %v787 = vpow.pop %v786
        %v788 = vmul.f32 %v783, 1.442695
        %v789 = vpow.pop %v788
        %v790 = vmul.f32 %v784, 1.442695
        %v791 = vpow.pop %v790
        %v792 = vmul.f32 %v785, 1.442695
        %v793 = vpow.pop %v792
        %v794 = vadd.f32 %v787, 1.0
        %v795 = vadd.f32 %v789, 1.0
        %v796 = vadd.f32 %v791, 1.0
        %v797 = vadd.f32 %v793, 1.0
        %v798 = vrcp.pop %v794
        %v799 = vmul.f32 %v794, %v798
        %v800 = vsub.f32 1.0, %v799
        %v801 = vmul.f32 %v798, %v800
        %v802 = vadd.f32 %v798, %v801
        %vm803 = vweird.f32 %v794
        %vm804 = vweird.f32 %v798
        %vm805 = vmor %vm803, %vm804
        %v806 = vsel %vm805, %v798, %v802
        %v807 = vand.u32 2147483647, %v794
        %vm808 = vcmp.eq.f32.partialorder %v807, 8.507059e+37
        %v809 = vand.u32 %v794, 2147483648
        %v810 = vor.u32 1.1754944e-38, %v809
        %v811 = vsel %vm808, %v810, %v806
        %v812 = vmul.f32 1.0, %v811
        %v813 = vrcp.pop %v795
        %v814 = vmul.f32 %v795, %v813
        %v815 = vsub.f32 1.0, %v814
        %v816 = vmul.f32 %v813, %v815
        %v817 = vadd.f32 %v813, %v816
        %vm818 = vweird.f32 %v795
        %vm819 = vweird.f32 %v813
        %vm820 = vmor %vm818, %vm819
        %v821 = vsel %vm820, %v813, %v817
        %v822 = vand.u32 2147483647, %v795
        %vm823 = vcmp.eq.f32.partialorder %v822, 8.507059e+37
        %v824 = vand.u32 %v795, 2147483648
        %v825 = vor.u32 1.1754944e-38, %v824
        %v826 = vsel %vm823, %v825, %v821
        %v827 = vmul.f32 1.0, %v826
        %v828 = vrcp.pop %v796
        %v829 = vmul.f32 %v796, %v828
        %v830 = vsub.f32 1.0, %v829
        %v831 = vmul.f32 %v828, %v830
        %v832 = vadd.f32 %v828, %v831
        %vm833 = vweird.f32 %v796
        %vm834 = vweird.f32 %v828
        %vm835 = vmor %vm833, %vm834
        %v836 = vsel %vm835, %v828, %v832
        %v837 = vand.u32 2147483647, %v796
        %vm838 = vcmp.eq.f32.partialorder %v837, 8.507059e+37
        %v839 = vand.u32 %v796, 2147483648
        %v840 = vor.u32 1.1754944e-38, %v839
        %v841 = vsel %vm838, %v840, %v836
        %v842 = vmul.f32 1.0, %v841
        %v843 = vrcp.pop %v797
        %v844 = vmul.f32 %v797, %v843
        %v845 = vsub.f32 1.0, %v844
        %v846 = vmul.f32 %v843, %v845
        %v847 = vadd.f32 %v843, %v846
        %vm848 = vweird.f32 %v797
        %vm849 = vweird.f32 %v843
        %vm850 = vmor %vm848, %vm849
        %v851 = vsel %vm850, %v843, %v847
        %v852 = vand.u32 2147483647, %v797
        %vm853 = vcmp.eq.f32.partialorder %v852, 8.507059e+37
        %v854 = vand.u32 %v797, 2147483648
        %v855 = vor.u32 1.1754944e-38, %v854
        %v856 = vsel %vm853, %v855, %v851
        %v857 = vmul.f32 1.0, %v856
        %v858 = vmul.f32 %v694, %v812
        %v859 = vmul.f32 %v722, %v827
        %v860 = vmul.f32 %v696, %v842
        %v861 = vmul.f32 %v724, %v857
        %v862 = vmul.f32 %v858, %v750
        %v863 = vmul.f32 %v859, %v778
        %v864 = vmul.f32 %v860, %v752
        %v865 = vmul.f32 %v861, %v780
        %v866 = vld [vmem:[#allocation8] sm:$0xff]
        %v867 = vld [vmem:[#allocation8 + $0x8] sm:$0xff]
        %v868 = vld [vmem:[#allocation8 + $0x10] sm:$0xff]
        %v869 = vld [vmem:[#allocation8 + $0x18] sm:$0xff]
        %v870 = vpack.c.bf16 %v864, %v862
        %v871 = vpack.c.bf16 %v865, %v863
        %v872 = vld [vmem:[%s238] sm:$0xff]
        %v873 = vld [vmem:[%s238 + $0x8] sm:$0xff]
        %v874 = vld [vmem:[%s238 + $0x10] sm:$0xff]
        %v875 = vld [vmem:[%s238 + $0x18] sm:$0xff]
        %v876 = vld [vmem:[%s238 + $0x20] sm:$0xff]
        %v877 = vld [vmem:[%s238 + $0x28] sm:$0xff]
        %v878 = vld [vmem:[%s238 + $0x30] sm:$0xff]
        %v879 = vld [vmem:[%s238 + $0x38] sm:$0xff]
        %v880 = vld [vmem:[%s238 + $0x40] sm:$0xff]
        %v881 = vld [vmem:[%s238 + $0x48] sm:$0xff]
        %v882 = vld [vmem:[%s238 + $0x50] sm:$0xff]
        %v883 = vld [vmem:[%s238 + $0x58] sm:$0xff]
        %v884 = vld [vmem:[%s238 + $0x60] sm:$0xff]
        %v885 = vld [vmem:[%s238 + $0x68] sm:$0xff]
        %v886 = vld [vmem:[%s238 + $0x70] sm:$0xff]
        %v887 = vld [vmem:[%s238 + $0x78] sm:$0xff]
        %v888 = vld [vmem:[%s238 + $0x80] sm:$0xff]
        %v889 = vld [vmem:[%s238 + $0x88] sm:$0xff]
        %v890 = vld [vmem:[%s238 + $0x90] sm:$0xff]
        %v891 = vld [vmem:[%s238 + $0x98] sm:$0xff]
        %v892 = vld [vmem:[%s238 + $0xa0] sm:$0xff]
        %v893 = vld [vmem:[%s238 + $0xa8] sm:$0xff]
        %v894 = vld [vmem:[%s238 + $0xb0] sm:$0xff]
        %v895 = vld [vmem:[%s238 + $0xb8] sm:$0xff]
        %v896 = vld [vmem:[%s238 + $0xc0] sm:$0xff]
        %v897 = vld [vmem:[%s238 + $0xc8] sm:$0xff]
        %v898 = vld [vmem:[%s238 + $0xd0] sm:$0xff]
        %v899 = vld [vmem:[%s238 + $0xd8] sm:$0xff]
        %v900 = vld [vmem:[%s238 + $0xe0] sm:$0xff]
        %v901 = vld [vmem:[%s238 + $0xe8] sm:$0xff]
        %v902 = vld [vmem:[%s238 + $0xf0] sm:$0xff]
        %v903 = vld [vmem:[%s238 + $0xf8] sm:$0xff]
        %v936 = vunpack.c.l.b16 %v872
        %v937 = vunpack.c.h.b16 %v872
        %v938 = vunpack.c.l.b16 %v873
        %v939 = vunpack.c.h.b16 %v873
        %v940 = vunpack.c.l.b16 %v874
        %v941 = vunpack.c.h.b16 %v874
        %v942 = vunpack.c.l.b16 %v875
        %v943 = vunpack.c.h.b16 %v875
        %v944 = vunpack.c.l.b16 %v876
        %v945 = vunpack.c.h.b16 %v876
        %v946 = vunpack.c.l.b16 %v877
        %v947 = vunpack.c.h.b16 %v877
        %v948 = vunpack.c.l.b16 %v878
        %v949 = vunpack.c.h.b16 %v878
        %v950 = vunpack.c.l.b16 %v879
        %v951 = vunpack.c.h.b16 %v879
        %v952 = vunpack.c.l.b16 %v880
        %v953 = vunpack.c.h.b16 %v880
        %v954 = vunpack.c.l.b16 %v881
        %v955 = vunpack.c.h.b16 %v881
        %v956 = vunpack.c.l.b16 %v882
        %v957 = vunpack.c.h.b16 %v882
        %v958 = vunpack.c.l.b16 %v883
        %v959 = vunpack.c.h.b16 %v883
        %v960 = vunpack.c.l.b16 %v884
        %v961 = vunpack.c.h.b16 %v884
        %v962 = vunpack.c.l.b16 %v885
        %v963 = vunpack.c.h.b16 %v885
        %v964 = vunpack.c.l.b16 %v886
        %v965 = vunpack.c.h.b16 %v886
        %v966 = vunpack.c.l.b16 %v887
        %v967 = vunpack.c.h.b16 %v887
        %v968 = vunpack.c.l.b16 %v888
        %v969 = vunpack.c.h.b16 %v888
        %v970 = vunpack.c.l.b16 %v889
        %v971 = vunpack.c.h.b16 %v889
        %v972 = vunpack.c.l.b16 %v890
        %v973 = vunpack.c.h.b16 %v890
        %v974 = vunpack.c.l.b16 %v891
        %v975 = vunpack.c.h.b16 %v891
        %v976 = vunpack.c.l.b16 %v892
        %v977 = vunpack.c.h.b16 %v892
        %v978 = vunpack.c.l.b16 %v893
        %v979 = vunpack.c.h.b16 %v893
        %v980 = vunpack.c.l.b16 %v894
        %v981 = vunpack.c.h.b16 %v894
        %v982 = vunpack.c.l.b16 %v895
        %v983 = vunpack.c.h.b16 %v895
        %v984 = vunpack.c.l.b16 %v896
        %v985 = vunpack.c.h.b16 %v896
        %v986 = vunpack.c.l.b16 %v897
        %v987 = vunpack.c.h.b16 %v897
        %v988 = vunpack.c.l.b16 %v898
        %v989 = vunpack.c.h.b16 %v898
        %v990 = vunpack.c.l.b16 %v899
        %v991 = vunpack.c.h.b16 %v899
        %v992 = vunpack.c.l.b16 %v900
        %v993 = vunpack.c.h.b16 %v900
        %v994 = vunpack.c.l.b16 %v901
        %v995 = vunpack.c.h.b16 %v901
        %v996 = vunpack.c.l.b16 %v902
        %v997 = vunpack.c.h.b16 %v902
        %v998 = vunpack.c.l.b16 %v903
        %v999 = vunpack.c.h.b16 %v903
        %v1000 = vpack.c.b16 %v938, %v936
        %v1001 = vpack.c.b16 %v939, %v937
        %v1002 = vpack.c.b16 %v942, %v940
        %v1003 = vpack.c.b16 %v943, %v941
        %v1004 = vpack.c.b16 %v946, %v944
        %v1005 = vpack.c.b16 %v947, %v945
        %v1006 = vpack.c.b16 %v950, %v948
        %v1007 = vpack.c.b16 %v951, %v949
        %v1008 = vpack.c.b16 %v954, %v952
        %v1009 = vpack.c.b16 %v955, %v953
        %v1010 = vpack.c.b16 %v958, %v956
        %v1011 = vpack.c.b16 %v959, %v957
        %v1012 = vpack.c.b16 %v962, %v960
        %v1013 = vpack.c.b16 %v963, %v961
        %v1014 = vpack.c.b16 %v966, %v964
        %v1015 = vpack.c.b16 %v967, %v965
        %v1016 = vpack.c.b16 %v970, %v968
        %v1017 = vpack.c.b16 %v971, %v969
        %v1018 = vpack.c.b16 %v974, %v972
        %v1019 = vpack.c.b16 %v975, %v973
        %v1020 = vpack.c.b16 %v978, %v976
        %v1021 = vpack.c.b16 %v979, %v977
        %v1022 = vpack.c.b16 %v982, %v980
        %v1023 = vpack.c.b16 %v983, %v981
        %v1024 = vpack.c.b16 %v986, %v984
        %v1025 = vpack.c.b16 %v987, %v985
        %v1026 = vpack.c.b16 %v990, %v988
        %v1027 = vpack.c.b16 %v991, %v989
        %v1028 = vpack.c.b16 %v994, %v992
        %v1029 = vpack.c.b16 %v995, %v993
        %v1030 = vpack.c.b16 %v998, %v996
        %v1031 = vpack.c.b16 %v999, %v997
        %1064 = vmatpush.bf16.msra.mxu0 %v1014
        %1065 = vmatpush.bf16.msra.mxu0 %v1012
        %1066 = vmatpush.bf16.msra.mxu0 %v1010
        %1067 = vmatpush.bf16.msra.mxu0 %v1008
        %1068 = vmatpush.bf16.msra.mxu0 %v1006
        %1069 = vmatpush.bf16.msra.mxu0 %v1004
        %1070 = vmatpush.bf16.msra.mxu0 %v1002
        %1071 = vmatpush.bf16.msra.mxu0 %v1000
        %1072 = vmatmul.bf16.gmra.mxu0 %v870
        %v1073 = vpop.f32.mrf.mxu0
        %v1074 = vadd.f32 0.0, %v1073
        %v1075 = vpop.f32.mrf.mxu0
        %v1076 = vadd.f32 0.0, %v1075
        %1077 = vdwg.mxu0
        %1078 = vmatpush.bf16.msra.mxu0 %v1030
        %1079 = vmatpush.bf16.msra.mxu0 %v1028
        %1080 = vmatpush.bf16.msra.mxu0 %v1026
        %1081 = vmatpush.bf16.msra.mxu0 %v1024
        %1082 = vmatpush.bf16.msra.mxu0 %v1022
        %1083 = vmatpush.bf16.msra.mxu0 %v1020
        %1084 = vmatpush.bf16.msra.mxu0 %v1018
        %1085 = vmatpush.bf16.msra.mxu0 %v1016
        %1086 = vmatmul.bf16.gmra.mxu0 %v871
        %v1087 = vpop.f32.mrf.mxu0
        %v1088 = vadd.f32 %v1074, %v1087
        %v1089 = vpop.f32.mrf.mxu0
        %v1090 = vadd.f32 %v1076, %v1089
        %1091 = vdwg.mxu0
        %1092 = vmatpush.bf16.msra.mxu0 %v1015
        %1093 = vmatpush.bf16.msra.mxu0 %v1013
        %1094 = vmatpush.bf16.msra.mxu0 %v1011
        %1095 = vmatpush.bf16.msra.mxu0 %v1009
        %1096 = vmatpush.bf16.msra.mxu0 %v1007
        %1097 = vmatpush.bf16.msra.mxu0 %v1005
        %1098 = vmatpush.bf16.msra.mxu0 %v1003
        %1099 = vmatpush.bf16.msra.mxu0 %v1001
        %1100 = vmatmul.bf16.gmra.mxu0 %v870
        %v1101 = vpop.f32.mrf.mxu0
        %v1102 = vadd.f32 0.0, %v1101
        %v1103 = vpop.f32.mrf.mxu0
        %v1104 = vadd.f32 0.0, %v1103
        %1105 = vdwg.mxu0
        %1106 = vmatpush.bf16.msra.mxu0 %v1031
        %1107 = vmatpush.bf16.msra.mxu0 %v1029
        %1108 = vmatpush.bf16.msra.mxu0 %v1027
        %1109 = vmatpush.bf16.msra.mxu0 %v1025
        %1110 = vmatpush.bf16.msra.mxu0 %v1023
        %1111 = vmatpush.bf16.msra.mxu0 %v1021
        %1112 = vmatpush.bf16.msra.mxu0 %v1019
        %1113 = vmatpush.bf16.msra.mxu0 %v1017
        %1114 = vmatmul.bf16.gmra.mxu0 %v871
        %v1115 = vpop.f32.mrf.mxu0
        %v1116 = vadd.f32 %v1102, %v1115
        %v1117 = vpop.f32.mrf.mxu0
        %v1118 = vadd.f32 %v1104, %v1117
        %1119 = vdwg.mxu0
        %v1120 = vadd.f32 %v866, %v1088
        %v1121 = vadd.f32 %v867, %v1116
        %v1122 = vadd.f32 %v868, %v1090
        %v1123 = vadd.f32 %v869, %v1118
        %1124 = vst [vmem:[#allocation8] sm:$0xff] %v1120
        %1125 = vst [vmem:[#allocation8 + $0x8] sm:$0xff] %v1121
        %1126 = vst [vmem:[#allocation8 + $0x10] sm:$0xff] %v1122
        %1127 = vst [vmem:[#allocation8 + $0x18] sm:$0xff] %v1123
        // Predicated region
        $region49: #{tpu_custom_call.1} parent=31 // pred_check
          %p1128 = pneg %p127
        $region50: #{tpu_custom_call.1} parent=31 // pred_check_branch
          %1130 = sbr.rel (%p1128) target = $region52
        $region51: #{tpu_custom_call.1} parent=31 // pred_region
          %s1131 = smul.u32 2, %s23
          %1133 = vsyncadd [#allocation4], 0
          %s1134 = smul.addr %s1131, 2
          %s1135 = smul.addr %s1134, 8
          %s1136 = scalar_lea.hbm %s3, %s1135
          %s1137 = sshll.u32 [#allocation8], 4
          %s1138 = int_to_ptr.vmem [resolvable:$true] %s1137
          %s1139 = sshll.u32 %s1136, 4
          %s1140 = int_to_ptr.hbm [resolvable:$true] %s1139
          %1145 = dma.vmem_to_hbm [thread:$0]  %s1138, 512, %s1140, [#allocation4], 256, 256, 16
        $region52: #{tpu_custom_call.1} parent=31 // pred_fallthru
          _
        // Predicated region
        $region53: #{tpu_custom_call.1} parent=31 // pred_check
          %p1146 = pneg %p127
        $region54: #{tpu_custom_call.1} parent=31 // pred_check_branch
          %1148 = sbr.rel (%p1146) target = $region56
        $region55: #{tpu_custom_call.1} parent=31 // pred_region
          %1150 = dma.done [#allocation4], 512
        $region56: #{tpu_custom_call.1} parent=31 // pred_fallthru
          _
      $region32: #{tpu_custom_call.1} parent=5 // pred_fallthru
        _
      %p1151 = scmp.le.s32.totalorder 2, %s14
      // Predicated region
      $region57: #{tpu_custom_call.1} parent=5 // pred_check
        %p1152 = pneg %p1151
      $region58: #{tpu_custom_call.1} parent=5 // pred_check_branch
        %1154 = sbr.rel (%p1152) target = $region60
      $region59: #{tpu_custom_call.1} parent=5 // pred_region
        %s1155 = ssub.s32 %s14, 2
      $region60: #{tpu_custom_call.1} parent=5 // pred_fallthru
        _
    $region6: #{tpu_custom_call.1} parent=1 // loop_footer
      %s18 = sadd.s32 1, %s14
    $region7: #{tpu_custom_call.1} parent=1 // loop_footer_branch
      %13 = sbr.rel target = $region3
    $region8: #{tpu_custom_call.1} parent=1 // loop_exit
      _
    %1156 = vsyncpa [#allocation3], 1
    %s1157 = scalar_lea.sflag [#allocation3], 1
    %1158 = vsyncpa %s1157, 1
    %1159 = vsyncpa [#allocation6], 1
    %s1160 = scalar_lea.sflag [#allocation6], 1
    %1161 = vsyncpa %s1160, 1
    %1162 = vsyncpa [#allocation4], 1
    %s1163 = scalar_lea.sflag [#allocation4], 1
    %1164 = vsyncpa %s1163, 1

</llo_original>
